<compile_context>
chip_gen: v5e
topology: v5e:2x2
jax: 0.10.0
libtpu: 0.0.40
codegen_flags: <defaults>
</compile_context>

<pallas_src>
import functools

import jax
import jax.numpy as jnp
from jax import lax
from jax.experimental import pallas as pl
from jax.experimental.pallas import tpu as pltpu


def _cbrelu_kernel(w_ref, shift_ref, p_ref, o_ref):
    # w_ref:     (cout_pad, k_pad)   bf16 BN-scale-folded weights, resident (Buffered(1))
    # shift_ref: (cout_pad, 1)       f32 folded BN shift, resident (Buffered(1))
    # p_ref:     (k_pad, tile_s)     bf16 im2col columns for this spatial tile
    # o_ref:     (cout_pad, tile_s)  f32 output tile (lane-dense, channel-major)
    acc = jnp.dot(w_ref[...], p_ref[...], preferred_element_type=jnp.float32)
    o_ref[...] = jnp.maximum(acc + shift_ref[...], 0.0)


def _round_up(x, m):
    return (x + m - 1) // m * m


def _choose_tile_s(n_batch, s_len):
    # Largest lane tile (multiple of 128, capped at 2048) that still yields
    # >= 8 total grid steps (>= 4 per TensorCore on v7x's 2 TCs); otherwise
    # fall back to the minimum lane-dense tile of 128.
    for tile in (2048, 1024, 512, 256, 128):
        if s_len >= tile and n_batch * (-(-s_len // tile)) >= 8:
            return tile
    return 128


@functools.partial(jax.jit, static_argnames=("stride", "padding", "compute_dtype"))
def cbrelu_forward(x_nchw, weight_oihw, gamma, beta, running_mean, running_var,
                   *, stride=1, padding=0, eps=1e-5, compute_dtype=jnp.bfloat16):
    """Conv2d(bias=False) -> BatchNorm2d(eval) -> ReLU via one Pallas MXU matmul kernel.

    x_nchw:      (N, Cin, H, W)      -- PyTorch layout (kept end to end; no transposes)
    weight_oihw: (Cout, Cin, KH, KW) -- PyTorch Conv2d weight layout
    """
    n, cin, h, w = x_nchw.shape
    cout, cin_w, kh, kw = weight_oihw.shape
    assert cin_w == cin, "groups != 1 not supported"

    # ---- im2col in compute dtype (cast BEFORE materializing the 9x patches) ----
    x = x_nchw.astype(compute_dtype)
    patches = lax.conv_general_dilated_patches(
        x, (kh, kw), (stride, stride),
        padding=((padding, padding), (padding, padding)),
        dimension_numbers=("NCHW", "OIHW", "NCHW"))
    # patches: (N, K, Ho, Wo) with feature order (cin, kh, kw) -> matches
    # weight_oihw.reshape(cout, cin*kh*kw) with no weight transpose needed.
    k_dim = cin * kh * kw
    ho, wo = patches.shape[2], patches.shape[3]
    s = ho * wo
    patches = patches.reshape(n, k_dim, s)

    # ---- fold BatchNorm (eval): scale into the weights, shift as epilogue add ----
    scale = (gamma / jnp.sqrt(running_var + eps)).astype(jnp.float32)   # (Cout,)
    shift = (beta - running_mean * scale).astype(jnp.float32)           # (Cout,)
    w_mat = weight_oihw.reshape(cout, k_dim).astype(jnp.float32) * scale[:, None]

    # ---- pad to clean TPU tiles (all padding is zeros -> contributes nothing) ----
    cout_pad = _round_up(cout, 8)        # f32 output sublane multiple
    k_pad = _round_up(k_dim, 16)         # bf16 sublane multiple for the patch tiles
    tile_s = _choose_tile_s(n, s)
    s_pad = _round_up(s, tile_s)

    patches = jnp.pad(patches, ((0, 0), (0, k_pad - k_dim), (0, s_pad - s)))
    w_mat = jnp.pad(w_mat, ((0, cout_pad - cout),
                            (0, k_pad - k_dim))).astype(compute_dtype)
    shift_col = jnp.pad(shift, (0, cout_pad - cout)).reshape(cout_pad, 1)

    # ---- explicit VMEM budget (v7x: 64 MiB physical / 32 MiB scoped default) ----
    itemsize = jnp.dtype(compute_dtype).itemsize
    step_bytes = (2 * k_pad * tile_s * itemsize        # double-buffered patch tile
                  + cout_pad * k_pad * itemsize        # resident weights (1 buffer)
                  + cout_pad * 128 * 4                 # resident shift (padded tile)
                  + 2 * cout_pad * tile_s * 4)         # double-buffered f32 out tile
    vmem_limit = int(min(max(4 * step_bytes, 8 * 1024 * 1024), 32 * 1024 * 1024))

    cost = pl.CostEstimate(                            # consistent padded dims
        flops=2 * n * s_pad * k_pad * cout_pad,
        transcendentals=0,
        bytes_accessed=(n * k_pad * s_pad * itemsize   # patches read
                        + cout_pad * k_pad * itemsize  # weights read
                        + cout_pad * 4                 # shift read
                        + n * cout_pad * s_pad * 4))   # f32 output write

    out = pl.pallas_call(
        _cbrelu_kernel,
        out_shape=jax.ShapeDtypeStruct((n, cout_pad, s_pad), jnp.float32),
        grid_spec=pltpu.PrefetchScalarGridSpec(
            num_scalar_prefetch=0,
            grid=(n, s_pad // tile_s),
            in_specs=[
                # Invariant across the grid -> single VMEM buffer.
                pl.BlockSpec((cout_pad, k_pad), lambda nb, sb: (0, 0),
                             pipeline_mode=pl.Buffered(1)),
                pl.BlockSpec((cout_pad, 1), lambda nb, sb: (0, 0),
                             pipeline_mode=pl.Buffered(1)),
                # Streaming patch columns: batch dim squeezed, lane-dense tile.
                pl.BlockSpec((None, k_pad, tile_s), lambda nb, sb: (nb, 0, sb)),
            ],
            out_specs=pl.BlockSpec((None, cout_pad, tile_s),
                                   lambda nb, sb: (nb, 0, sb)),
        ),
        compiler_params=pltpu.CompilerParams(
            dimension_semantics=("parallel", "parallel"),
            vmem_limit_bytes=vmem_limit),
        cost_estimate=cost,
    )(w_mat, shift_col, patches)

    # Strip padding; the result is already channel-major NCHW -> no transpose.
    return out[:, :cout, :s].reshape(n, cout, ho, wo)


def _reference(x_nchw, weight_oihw, gamma, beta, running_mean, running_var,
               *, stride, padding, eps=1e-5):
    y = lax.conv_general_dilated(
        x_nchw.astype(jnp.float32), weight_oihw.astype(jnp.float32),
        window_strides=(stride, stride),
        padding=((padding, padding), (padding, padding)),
        dimension_numbers=("NCHW", "OIHW", "NCHW"))
    scale = gamma / jnp.sqrt(running_var + eps)
    shift = beta - running_mean * scale
    y = y * scale[None, :, None, None] + shift[None, :, None, None]
    return jnp.maximum(y, 0.0)


if __name__ == "__main__":
    # CBRelu(in_channels=4, out_channels=8, kernel_size=3, stride=1, padding=1)
    N, CIN, H, W = 2, 4, 16, 16
    COUT, K, STRIDE, PAD = 8, 3, 1, 1

    key = jax.random.PRNGKey(0)
    k_x, k_w, k_g, k_b, k_m, k_v = jax.random.split(key, 6)

    x = jax.random.normal(k_x, (N, CIN, H, W), dtype=jnp.float32)
    weight = jax.random.normal(k_w, (COUT, CIN, K, K), dtype=jnp.float32) * 0.1
    gamma = 1.0 + 0.1 * jax.random.normal(k_g, (COUT,), dtype=jnp.float32)
    beta = 0.1 * jax.random.normal(k_b, (COUT,), dtype=jnp.float32)
    running_mean = 0.1 * jax.random.normal(k_m, (COUT,), dtype=jnp.float32)
    running_var = jax.random.uniform(k_v, (COUT,), minval=0.5, maxval=1.5,
                                     dtype=jnp.float32)

    out = cbrelu_forward(x, weight, gamma, beta, running_mean, running_var,
                         stride=STRIDE, padding=PAD)
    out = jax.block_until_ready(out)

    ref = _reference(x, weight, gamma, beta, running_mean, running_var,
                     stride=STRIDE, padding=PAD)
    assert out.shape == (N, COUT, H, W), out.shape
    # bf16 patches/weights with f32 MXU accumulation: loosened tolerance vs f32 ref.
    assert jnp.allclose(out, ref, atol=3e-2, rtol=3e-2), \
        float(jnp.max(jnp.abs(out - ref)))

    print("KERNEL_OK")
</pallas_src>

<mosaic_0001>
module attributes {stable_mosaic.version = 11 : i64} {
  func.func @_cbrelu_kernel(%arg0: i32, %arg1: i32, %arg2: memref<8x48xbf16, #tpu.memory_space<vmem>>, %arg3: memref<8x1xf32, #tpu.memory_space<vmem>>, %arg4: memref<1x48x128xbf16, #tpu.memory_space<vmem>>, %arg5: memref<1x8x128xf32, #tpu.memory_space<vmem>>) attributes {dimension_semantics = [#tpu.dimension_semantics<parallel>, #tpu.dimension_semantics<parallel>], iteration_bounds = array<i64: 2, 2>, scalar_prefetch = 0 : i64, scratch_operands = 0 : i64, tpu.core_type = #tpu.core_type<tc>, window_params = [{pipeline_mode = #tpu.pipeline_mode<synchronous>, transform_indices = @transform_0, window_bounds = array<i64: 8, 48>}, {pipeline_mode = #tpu.pipeline_mode<synchronous>, transform_indices = @transform_1, window_bounds = array<i64: 8, 1>}, {transform_indices = @transform_2, window_bounds = array<i64: 1, 48, 128>}, {transform_indices = @transform_3, window_bounds = array<i64: 1, 8, 128>}]} {
    %c0 = arith.constant 0 : index
    %c0_0 = arith.constant 0 : index
    %0 = vector.load %arg2[%c0, %c0_0] : memref<8x48xbf16, #tpu.memory_space<vmem>>, vector<8x48xbf16>
    %c0_1 = arith.constant 0 : index
    %c0_2 = arith.constant 0 : index
    %c0_3 = arith.constant 0 : index
    %1 = vector.load %arg4[%c0_1, %c0_2, %c0_3] : memref<1x48x128xbf16, #tpu.memory_space<vmem>>, vector<1x48x128xbf16>
    %2 = vector.shape_cast %1 : vector<1x48x128xbf16> to vector<48x128xbf16>
    %cst = arith.constant dense<0.000000e+00> : vector<8x128xf32>
    %3 = tpu.matmul %0, %2, %cst {dimension_numbers = #tpu.dot_dimension_numbers<[1], [0], [0], [1], [0, 0, 1, 1], [], []>} : vector<8x48xbf16>, vector<48x128xbf16>, vector<8x128xf32> -> vector<8x128xf32>
    %c0_4 = arith.constant 0 : index
    %c0_5 = arith.constant 0 : index
    %4 = vector.load %arg3[%c0_4, %c0_5] : memref<8x1xf32, #tpu.memory_space<vmem>>, vector<8x1xf32>
    %5 = vector.broadcast %4 : vector<8x1xf32> to vector<8x128xf32>
    %6 = arith.addf %3, %5 : vector<8x128xf32>
    %cst_6 = arith.constant 0.000000e+00 : f32
    %7 = vector.broadcast %cst_6 : f32 to vector<8x128xf32>
    %8 = arith.maximumf %6, %7 : vector<8x128xf32>
    %c0_7 = arith.constant 0 : index
    %c0_8 = arith.constant 0 : index
    %c0_9 = arith.constant 0 : index
    %9 = vector.load %arg5[%c0_7, %c0_8, %c0_9] : memref<1x8x128xf32, #tpu.memory_space<vmem>>, vector<1x8x128xf32>
    %10 = vector.shape_cast %9 : vector<1x8x128xf32> to vector<8x128xf32>
    %11 = vector.shape_cast %8 : vector<8x128xf32> to vector<1x8x128xf32>
    tpu.vector_store %arg5[%c0_7, %c0_8, %c0_9], %11 {strides = array<i32>} : memref<1x8x128xf32, #tpu.memory_space<vmem>>, vector<1x8x128xf32>,
    return
  }
  func.func @transform_0(%arg0: i32, %arg1: i32) -> (i32, i32) {
    %c0_i32 = arith.constant 0 : i32
    %c0_i32_0 = arith.constant 0 : i32
    %c0_i32_1 = arith.constant 0 : i32
    return %c0_i32, %c0_i32_0 : i32, i32
  }
  func.func @transform_1(%arg0: i32, %arg1: i32) -> (i32, i32) {
    %c0_i32 = arith.constant 0 : i32
    %c0_i32_0 = arith.constant 0 : i32
    %c0_i32_1 = arith.constant 0 : i32
    return %c0_i32, %c0_i32_0 : i32, i32
  }
  func.func @transform_2(%arg0: i32, %arg1: i32) -> (i32, i32, i32) {
    %c0_i32 = arith.constant 0 : i32
    %c0_i32_0 = arith.constant 0 : i32
    return %arg0, %c0_i32, %arg1 : i32, i32, i32
  }
  func.func @transform_3(%arg0: i32, %arg1: i32) -> (i32, i32, i32) {
    %c0_i32 = arith.constant 0 : i32
    %c0_i32_0 = arith.constant 0 : i32
    return %arg0, %c0_i32, %arg1 : i32, i32, i32
  }
}

</mosaic_0001>

<llo_original>
// kernel: cbrelu_forward.1
$region0: #{cbrelu_forward.1}
  #allocation0 [shape = 'u32[]', space=smem, size = 0x4, offset = 0x4, fixed_abs, tag = 'smem constant byte address 0x4 - core index']
  #allocation1 [shape = 'u32[72,128]{1,0:T(1,128)}', space=vmem, size = 0x9000, scoped, tag = 'internal scratch']
  %s0 = inlined_call_operand.vmem [shape: bf16[8,48], index: 0, kind: input, shape index: {}]
  %s1 = inlined_call_operand.vmem [shape: f32[8,1], index: 1, kind: input, shape index: {}]
  %s2 = inlined_call_operand.vmem [shape: bf16[2,48,256], index: 2, kind: input, shape index: {}]
  %s3 = inlined_call_operand.vmem [shape: f32[2,8,256], index: 3, kind: output, shape index: {}]
  %s4 = sld [smem:[#allocation0]]
  $region86: #{cbrelu_forward.1} parent=0
    _
  %s6 = ssub.s32 1, %s4
  %s7 = scalar_select 0, %s6, %s4
  $region1: #{cbrelu_forward.1} parent=0
    #allocation2 [shape = 'u8[24576]{0}', space=vmem, size = 0x6000, scoped, tag = 'input window, operand 2']
    loop: start=0, step=1, limit=6
    $region2: #{cbrelu_forward.1} parent=1 // loop_pre_header
      _
    $region3: #{cbrelu_forward.1} parent=1 // loop_header
      %s9 = sphi 0, %s13
      %p10 = scmp.ge.s32.totalorder %s9, 6
      %s16 = sphi 0, %s28
      %s17 = sphi 0, %s24
      %s18 = sphi 0, %s16
      %s19 = sphi 0, %s17
      %s20 = sphi 0, %s18
      %s21 = sphi 0, %s19
      %s29 = sphi 0, %s29
      %s31 = sphi 0, %s29
      %s32 = sphi 0, %s31
      %s46 = sphi 0, %s32
      %s50 = sphi 0, %s50
      %s52 = sphi 0, %s50
      %s53 = sphi 0, %s52
      %s67 = sphi 0, %s53
      %s75 = sphi 0, %s77
      %s78 = sphi 0, %s75
      %s79 = sphi 0, %s78
      %s95 = sphi 0, %s79
      %s103 = sphi 0, %s105
      %s106 = sphi 0, %s103
      %s107 = sphi 0, %s106
      %s123 = sphi 0, %s107
    $region4: #{cbrelu_forward.1} parent=1 // loop_header_branch
      %12 = sbr.rel (%p10) target = $region8
    $region5: #{cbrelu_forward.1} parent=1 // loop_body
      %s14 = ssub.s32 %s9, 1
      %s15 = ssub.s32 %s9, 2
      %s22 = sadd.s32 1, %s17
      %p23 = scmp.ge.s32.totalorder %s22, 2
      %s24 = scalar_select %p23, 0, %s22
      %s25 = sadd.s32 1, %s16
      %s26 = scalar_select %p23, %s25, %s16
      %p27 = scmp.ge.s32.totalorder %s26, 2
      %s28 = scalar_select %p27, 0, %s26
      %s30 = sadd.s32 %s29, 1
      %p33 = scmp.eq.s32.totalorder %s9, 3
      %p34 = scmp.ne.s32.totalorder %s29, %s31
      %p35 = scmp.eq.s32.totalorder %s9, 0
      %p36 = por %p34, %p35
      %p37 = scmp.ne.s32.totalorder %s29, %s31
      %p38 = scmp.eq.s32.totalorder %s14, 3
      %p39 = por %p37, %p38
      %p40 = scmp.ne.s32.totalorder %s31, %s32
      %p41 = scmp.eq.s32.totalorder %s14, 0
      %p42 = por %p40, %p41
      %p43 = scmp.ne.s32.totalorder %s31, %s32
      %p44 = scmp.eq.s32.totalorder %s15, 3
      %p45 = por %p43, %p44
      %p47 = scmp.ne.s32.totalorder %s32, %s46
      %p48 = scmp.eq.s32.totalorder %s15, 0
      %p49 = por %p47, %p48
      %s51 = sadd.s32 %s50, 1
      %p54 = scmp.eq.s32.totalorder %s9, 3
      %p55 = scmp.ne.s32.totalorder %s50, %s52
      %p56 = scmp.eq.s32.totalorder %s9, 0
      %p57 = por %p55, %p56
      %p58 = scmp.ne.s32.totalorder %s50, %s52
      %p59 = scmp.eq.s32.totalorder %s14, 3
      %p60 = por %p58, %p59
      %p61 = scmp.ne.s32.totalorder %s52, %s53
      %p62 = scmp.eq.s32.totalorder %s14, 0
      %p63 = por %p61, %p62
      %p64 = scmp.ne.s32.totalorder %s52, %s53
      %p65 = scmp.eq.s32.totalorder %s15, 3
      %p66 = por %p64, %p65
      %p68 = scmp.ne.s32.totalorder %s53, %s67
      %p69 = scmp.eq.s32.totalorder %s15, 0
      %p70 = por %p68, %p69
      %s71 = ssub.s32 %s16, %s28
      %s72 = ssub.s32 %s17, %s24
      %s73 = sor.u32 %s71, %s72
      %p74 = scmp.eq.s32.totalorder %s73, 0
      %s76 = sadd.s32 %s75, 1
      %s77 = scalar_select %p74, %s75, %s76
      %p80 = pneg %p74
      %p81 = scmp.eq.s32.totalorder %s9, 3
      %p82 = por %p80, %p81
      %p83 = scmp.ne.s32.totalorder %s75, %s78
      %p84 = scmp.eq.s32.totalorder %s9, 0
      %p85 = por %p83, %p84
      %p86 = scmp.ne.s32.totalorder %s75, %s78
      %p87 = scmp.eq.s32.totalorder %s14, 3
      %p88 = por %p86, %p87
      %p89 = scmp.ne.s32.totalorder %s78, %s79
      %p90 = scmp.eq.s32.totalorder %s14, 0
      %p91 = por %p89, %p90
      %p92 = scmp.ne.s32.totalorder %s78, %s79
      %p93 = scmp.eq.s32.totalorder %s15, 3
      %p94 = por %p92, %p93
      %p96 = scmp.ne.s32.totalorder %s79, %s95
      %p97 = scmp.eq.s32.totalorder %s15, 0
      %p98 = por %p96, %p97
      %s99 = ssub.s32 %s16, %s28
      %s100 = ssub.s32 %s17, %s24
      %s101 = sor.u32 %s99, %s100
      %p102 = scmp.eq.s32.totalorder %s101, 0
      %s104 = sadd.s32 %s103, 1
      %s105 = scalar_select %p102, %s103, %s104
      %p108 = pneg %p102
      %p109 = scmp.eq.s32.totalorder %s9, 3
      %p110 = por %p108, %p109
      %p111 = scmp.ne.s32.totalorder %s103, %s106
      %p112 = scmp.eq.s32.totalorder %s9, 0
      %p113 = por %p111, %p112
      %p114 = scmp.ne.s32.totalorder %s103, %s106
      %p115 = scmp.eq.s32.totalorder %s14, 3
      %p116 = por %p114, %p115
      %p117 = scmp.ne.s32.totalorder %s106, %s107
      %p118 = scmp.eq.s32.totalorder %s14, 0
      %p119 = por %p117, %p118
      %p120 = scmp.ne.s32.totalorder %s106, %s107
      %p121 = scmp.eq.s32.totalorder %s15, 3
      %p122 = por %p120, %p121
      %p124 = scmp.ne.s32.totalorder %s107, %s123
      %p125 = scmp.eq.s32.totalorder %s15, 0
      %p126 = por %p124, %p125
      %p127 = scmp.le.s32.totalorder 1, %s9
      %p128 = scmp.lt.s32.totalorder %s9, 5
      %p129 = pnand %p127, %p128
      %p130 = pneg %p129
      // Predicated region
      $region9: #{cbrelu_forward.1} parent=5 // pred_check
        _
      $region10: #{cbrelu_forward.1} parent=5 // pred_check_branch
        %132 = sbr.rel (%p129) target = $region12
      $region11: #{cbrelu_forward.1} parent=5 // pred_region
        %s133 = ssub.s32 %s9, 1
        // Predicated region
        $region13: #{cbrelu_forward.1} parent=11 // pred_check
          %p134 = pneg %p42
        $region14: #{cbrelu_forward.1} parent=11 // pred_check_branch
          %136 = sbr.rel (%p134) target = $region16
        $region15: #{cbrelu_forward.1} parent=11 // pred_region
          _
        $region16: #{cbrelu_forward.1} parent=11 // pred_fallthru
          _
        // Predicated region
        $region17: #{cbrelu_forward.1} parent=11 // pred_check
          %p137 = pneg %p63
        $region18: #{cbrelu_forward.1} parent=11 // pred_check_branch
          %139 = sbr.rel (%p137) target = $region20
        $region19: #{cbrelu_forward.1} parent=11 // pred_region
          _
        $region20: #{cbrelu_forward.1} parent=11 // pred_fallthru
          _
      $region12: #{cbrelu_forward.1} parent=5 // pred_fallthru
        _
      %p140 = scmp.lt.s32.totalorder %s9, 4
      // Predicated region
      $region21: #{cbrelu_forward.1} parent=5 // pred_check
        %p141 = pneg %p140
      $region22: #{cbrelu_forward.1} parent=5 // pred_check_branch
        %143 = sbr.rel (%p141) target = $region24
      $region23: #{cbrelu_forward.1} parent=5 // pred_region
        // Predicated region
        $region25: #{cbrelu_forward.1} parent=23 // pred_check
          %p144 = pneg %p85
        $region26: #{cbrelu_forward.1} parent=23 // pred_check_branch
          %146 = sbr.rel (%p144) target = $region28
        $region27: #{cbrelu_forward.1} parent=23 // pred_region
          %s147 = sand.u32 %s75, 1
          %s148 = sand.u32 %s75, 1
          %s149 = smul.addr %s148, 24
          %s150 = scalar_lea.vmem [#allocation2], %s149
          %s151 = smul.addr %s16, 12
          %s152 = sadd.s32 %s17, %s151
          %s153 = smul.addr %s152, 4
          %s154 = scalar_lea.vmem %s2, %s153
          // Predicated region
          $region29: #{cbrelu_forward.1} parent=27 // pred_check
            _
          $region30: #{cbrelu_forward.1} parent=27 // pred_check_branch
            %156 = sbr.rel (0) target = $region32
          $region31: #{cbrelu_forward.1} parent=27 // pred_region
            // Predicated region
            $region33: #{cbrelu_forward.1} parent=31 // pred_check
              _
            $region34: #{cbrelu_forward.1} parent=31 // pred_check_branch
              %158 = sbr.rel target = $region36
            $region35: #{cbrelu_forward.1} parent=31 // pred_region
              // Predicated region
              $region48: #{cbrelu_forward.1} parent=35 // pred_check
                _
              $region49: #{cbrelu_forward.1} parent=35 // pred_check_branch
                %184 = sbr.rel (0) target = $region51
              $region50: #{cbrelu_forward.1} parent=35 // pred_region
                loop: start=0, step=1, limit=1
                $region52: #{cbrelu_forward.1} parent=50 // loop_pre_header
                  _
                $region53: #{cbrelu_forward.1} parent=50 // loop_header
                  %s186 = sphi 0, %s190
                  %p187 = scmp.ge.s32.totalorder %s186, 1
                  %s191 = sphi %s154, %s154
                  %s192 = sphi %s150, %s150
                $region54: #{cbrelu_forward.1} parent=50 // loop_header_branch
                  %189 = sbr.rel (%p187) target = $region58
                $region55: #{cbrelu_forward.1} parent=50 // loop_body
                  _
                $region56: #{cbrelu_forward.1} parent=50 // loop_footer
                  %s190 = sadd.s32 1, %s186
                $region57: #{cbrelu_forward.1} parent=50 // loop_footer_branch
                  %185 = sbr.rel target = $region53
                $region58: #{cbrelu_forward.1} parent=50 // loop_exit
                  _
                %s194 = ssub.s32 16, 1
                loop: start=0, step=1, limit=1
                $region59: #{cbrelu_forward.1} parent=50 // loop_pre_header
                  _
                $region60: #{cbrelu_forward.1} parent=50 // loop_header
                  %s196 = sphi 0, %s200
                  %p197 = scmp.ge.s32.totalorder %s196, 1
                  %s201 = sphi %s154, %s154
                  %s202 = sphi %s150, %s150
                $region61: #{cbrelu_forward.1} parent=50 // loop_header_branch
                  %199 = sbr.rel (%p197) target = $region65
                $region62: #{cbrelu_forward.1} parent=50 // loop_body
                  %v203 = vld [vmem:[%s201] sm:%s194]
                  %204 = vst [vmem:[%s202] sm:%s194] %v203
                  %v205 = vld [vmem:[%s201 + $0x8] sm:%s194]
                  %206 = vst [vmem:[%s202 + $0x4] sm:%s194] %v205
                  %v207 = vld [vmem:[%s201 + $0x10] sm:%s194]
                  %208 = vst [vmem:[%s202 + $0x8] sm:%s194] %v207
                  %v209 = vld [vmem:[%s201 + $0x18] sm:%s194]
                  %210 = vst [vmem:[%s202 + $0xc] sm:%s194] %v209
                  %v211 = vld [vmem:[%s201 + $0x20] sm:%s194]
                  %212 = vst [vmem:[%s202 + $0x10] sm:%s194] %v211
                  %v213 = vld [vmem:[%s201 + $0x28] sm:%s194]
                  %214 = vst [vmem:[%s202 + $0x14] sm:%s194] %v213
                $region63: #{cbrelu_forward.1} parent=50 // loop_footer
                  %s200 = sadd.s32 1, %s196
                $region64: #{cbrelu_forward.1} parent=50 // loop_footer_branch
                  %195 = sbr.rel target = $region60
                $region65: #{cbrelu_forward.1} parent=50 // loop_exit
                  _
              $region51: #{cbrelu_forward.1} parent=35 // pred_fallthru
                _
            $region36: #{cbrelu_forward.1} parent=31 // pred_fallthru
              _
            // Predicated region
            $region37: #{cbrelu_forward.1} parent=31 // pred_check
              _
            $region38: #{cbrelu_forward.1} parent=31 // pred_check_branch
              %160 = sbr.rel (0) target = $region40
            $region39: #{cbrelu_forward.1} parent=31 // pred_region
              %s162 = ssub.s32 16, 1
              loop: start=0, step=1, limit=1
              $region41: #{cbrelu_forward.1} parent=39 // loop_pre_header
                _
              $region42: #{cbrelu_forward.1} parent=39 // loop_header
                %s164 = sphi 0, %s168
                %p165 = scmp.ge.s32.totalorder %s164, 1
                %s169 = sphi %s154, %s154
                %s170 = sphi %s150, %s150
              $region43: #{cbrelu_forward.1} parent=39 // loop_header_branch
                %167 = sbr.rel (%p165) target = $region47
              $region44: #{cbrelu_forward.1} parent=39 // loop_body
                %v171 = vld [vmem:[%s169] sm:%s162]
                %172 = vst [vmem:[%s170] sm:%s162] %v171
                %v173 = vld [vmem:[%s169 + $0x8] sm:%s162]
                %174 = vst [vmem:[%s170 + $0x4] sm:%s162] %v173
                %v175 = vld [vmem:[%s169 + $0x10] sm:%s162]
                %176 = vst [vmem:[%s170 + $0x8] sm:%s162] %v175
                %v177 = vld [vmem:[%s169 + $0x18] sm:%s162]
                %178 = vst [vmem:[%s170 + $0xc] sm:%s162] %v177
                %v179 = vld [vmem:[%s169 + $0x20] sm:%s162]
                %180 = vst [vmem:[%s170 + $0x10] sm:%s162] %v179
                %v181 = vld [vmem:[%s169 + $0x28] sm:%s162]
                %182 = vst [vmem:[%s170 + $0x14] sm:%s162] %v181
              $region45: #{cbrelu_forward.1} parent=39 // loop_footer
                %s168 = sadd.s32 1, %s164
              $region46: #{cbrelu_forward.1} parent=39 // loop_footer_branch
                %163 = sbr.rel target = $region42
              $region47: #{cbrelu_forward.1} parent=39 // loop_exit
                _
            $region40: #{cbrelu_forward.1} parent=31 // pred_fallthru
              _
          $region32: #{cbrelu_forward.1} parent=27 // pred_fallthru
            _
          %215 = vnop
        $region28: #{cbrelu_forward.1} parent=23 // pred_fallthru
          _
      $region24: #{cbrelu_forward.1} parent=5 // pred_fallthru
        _
      %p216 = scmp.le.s32.totalorder 1, %s9
      %p217 = scmp.lt.s32.totalorder %s9, 5
      %p218 = pnand %p216, %p217
      %p219 = pneg %p218
      // Predicated region
      $region66: #{cbrelu_forward.1} parent=5 // pred_check
        _
      $region67: #{cbrelu_forward.1} parent=5 // pred_check_branch
        %221 = sbr.rel (%p218) target = $region69
      $region68: #{cbrelu_forward.1} parent=5 // pred_region
        %s222 = ssub.s32 %s9, 1
        %s223 = sand.u32 %s78, 1
        %s224 = sand.u32 %s78, 1
        %s225 = smul.addr %s224, 24
        %s226 = scalar_lea.vmem [#allocation2], %s225
        // Predicated region
        $region70: #{cbrelu_forward.1} parent=68 // pred_check
          %p227 = pneg %p91
        $region71: #{cbrelu_forward.1} parent=68 // pred_check_branch
          %229 = sbr.rel (%p227) target = $region73
        $region72: #{cbrelu_forward.1} parent=68 // pred_region
          _
        $region73: #{cbrelu_forward.1} parent=68 // pred_fallthru
          _
        %p230 = pneg %p42
        %p231 = pneg %p39
        %p232 = pneg %p63
        %p233 = pneg %p60
        %s234 = sand.u32 %s78, 1
        %s235 = sand.u32 %s78, 1
        %s236 = smul.addr %s235, 24
        %s237 = scalar_lea.vmem [#allocation2], %s236
        %p238 = pneg %p91
        %p239 = pneg %p88
        %p240 = pneg %p119
        %p241 = pneg %p116
        %p242 = scmp.lt.s32.totalorder %s18, 1
        %s243 = scalar_select %p242, %s18, 1
        %p244 = scmp.lt.s32.totalorder %s19, 1
        %s245 = scalar_select %p244, %s19, 1
        %s246 = smul.addr %s243, 2
        %s247 = sadd.s32 %s245, %s246
        %s248 = smul.addr %s247, 8
        %s249 = scalar_lea.vmem %s3, %s248
        %p250 = scmp.lt.s32.totalorder %s18, 1
        %s251 = scalar_select %p250, %s18, 1
        %p252 = scmp.lt.s32.totalorder %s19, 1
        %s253 = scalar_select %p252, %s19, 1
        %s254 = smul.addr %s251, 2
        %s255 = sadd.s32 %s253, %s254
        %s256 = smul.addr %s255, 8
        %s257 = scalar_lea.vmem %s3, %s256
        %v259 = vld [vmem:[%s0] sm:$0xf]
        %v260 = vld [vmem:[%s226] sm:$0xf]
        %v261 = vld [vmem:[%s226 + $0x4] sm:$0xf]
        %v262 = vld [vmem:[%s226 + $0x8] sm:$0xf]
        %v263 = vld [vmem:[%s226 + $0xc] sm:$0xf]
        %v264 = vld [vmem:[%s226 + $0x10] sm:$0xf]
        %v265 = vld [vmem:[%s226 + $0x14] sm:$0xf]
        %v266 = vld [vmem:[%s1] sm:$0xff]
        %268 = vset.pattern.permute.xlu0 0
        %269 = vperm.xlu0 %268, %v266
        %v270 = vpop.permute.xlu0 %269
        %v278 = vunpack.c.l.b16 %v260
        %v279 = vunpack.c.l.b16 %v261
        %v280 = vunpack.c.l.b16 %v262
        %v281 = vunpack.c.l.b16 %v263
        %v282 = vunpack.c.l.b16 %v264
        %v283 = vunpack.c.l.b16 %v265
        %v284 = vpack.c.b16 %v279, %v278
        %v285 = vpack.c.b16 %v281, %v280
        %v286 = vpack.c.b16 %v283, %v282
        %vm290 = vcmask 392192
        %v292 = vsel %vm290, %v259, 0
        %294 = vmatpush.bf16.msra.mxu0 0
        %295 = vmatpush.bf16.msra.mxu0 0
        %296 = vmatpush.bf16.msra.mxu0 0
        %297 = vmatpush.bf16.msra.mxu0 0
        %298 = vmatpush.bf16.msra.mxu0 0
        %299 = vmatpush.bf16.msra.mxu0 %v286
        %300 = vmatpush.bf16.msra.mxu0 %v285
        %301 = vmatpush.bf16.msra.mxu0 %v284
        %302 = vmatmul.bf16.gmra.mxu0 %v292
        %v303 = vpop.f32.mrf.mxu0
        %v304 = vadd.f32 %v270, %v303
        %v305 = vpop.f32.mrf.mxu0
        %306 = vdwg.mxu0
        %v307 = vmax.f32 %v304, 0.0
        %308 = vst [vmem:[%s257] sm:$0xff] %v307
        %p309 = scmp.lt.s32.totalorder %s18, 1
        %s310 = scalar_select %p309, %s18, 1
        %p311 = scmp.lt.s32.totalorder %s19, 1
        %s312 = scalar_select %p311, %s19, 1
        %s313 = smul.addr %s310, 2
        %s314 = sadd.s32 %s312, %s313
        %s315 = smul.addr %s314, 8
        %s316 = scalar_lea.vmem %s3, %s315
        // Predicated region
        $region74: #{cbrelu_forward.1} parent=68 // pred_check
          %p317 = pneg %p116
        $region75: #{cbrelu_forward.1} parent=68 // pred_check_branch
          %319 = sbr.rel (%p317) target = $region77
        $region76: #{cbrelu_forward.1} parent=68 // pred_region
          _
        $region77: #{cbrelu_forward.1} parent=68 // pred_fallthru
          _
      $region69: #{cbrelu_forward.1} parent=5 // pred_fallthru
        _
      %p320 = scmp.le.s32.totalorder 2, %s9
      // Predicated region
      $region78: #{cbrelu_forward.1} parent=5 // pred_check
        %p321 = pneg %p320
      $region79: #{cbrelu_forward.1} parent=5 // pred_check_branch
        %323 = sbr.rel (%p321) target = $region81
      $region80: #{cbrelu_forward.1} parent=5 // pred_region
        %s324 = ssub.s32 %s9, 2
        // Predicated region
        $region82: #{cbrelu_forward.1} parent=80 // pred_check
          %p325 = pneg %p122
        $region83: #{cbrelu_forward.1} parent=80 // pred_check_branch
          %327 = sbr.rel (%p325) target = $region85
        $region84: #{cbrelu_forward.1} parent=80 // pred_region
          %p328 = scmp.lt.s32.totalorder %s20, 1
          %s329 = scalar_select %p328, %s20, 1
          %p330 = scmp.lt.s32.totalorder %s21, 1
          %s331 = scalar_select %p330, %s21, 1
          %s332 = smul.addr %s329, 2
          %s333 = sadd.s32 %s331, %s332
          %s334 = smul.addr %s333, 8
          %s335 = scalar_lea.vmem %s3, %s334
        $region85: #{cbrelu_forward.1} parent=80 // pred_fallthru
          _
      $region81: #{cbrelu_forward.1} parent=5 // pred_fallthru
        _
    $region6: #{cbrelu_forward.1} parent=1 // loop_footer
      %s13 = sadd.s32 1, %s9
    $region7: #{cbrelu_forward.1} parent=1 // loop_footer_branch
      %8 = sbr.rel target = $region3
    $region8: #{cbrelu_forward.1} parent=1 // loop_exit
      _

</llo_original>
